<compile_context>
chip_gen: v7x
topology: tpu7x:2x2x1
jax: 0.10.0
libtpu: 0.0.40
codegen_flags: <defaults>
</compile_context>

<pallas_src>
import math
from functools import partial

import numpy as np
import jax
import jax.numpy as jnp
from jax.experimental import pallas as pl
from jax.experimental.pallas import tpu as pltpu


# ----------------------------- Pallas kernel -------------------------------

def _mlp_kernel(*refs, n_layers, acts):
    """refs = (x_ref, w_0..w_{L-1}, b_0..b_{L-1}, o_ref).

    x_ref:  (tm, D0p)  compute dtype (bf16)
    w_i:    (D_ip, D_{i+1}p) compute dtype (bf16)
    b_i:    (1, D_{i+1}p) f32
    o_ref:  (tm, D_Lp) f32
    All layers run back-to-back on the VMEM-resident activation (fused MLP).
    """
    x_ref = refs[0]
    w_refs = refs[1:1 + n_layers]
    b_refs = refs[1 + n_layers:1 + 2 * n_layers]
    o_ref = refs[1 + 2 * n_layers]

    compute_dtype = x_ref.dtype
    h = x_ref[...]
    for i in range(n_layers):
        acc = jnp.dot(h, w_refs[i][...],
                      preferred_element_type=jnp.float32)       # MXU, f32 accumulate
        acc = acc + b_refs[i][...]                               # bias (f32)
        a = acts[i]
        if a == "relu":
            acc = jnp.maximum(acc, 0.0)
        elif a == "lrelu":
            acc = jnp.where(acc >= 0.0, acc, 0.2 * acc)
        elif a == "tanh":
            acc = jnp.tanh(acc)
        # 'none': passthrough
        h = acc if i + 1 == n_layers else acc.astype(compute_dtype)
    o_ref[...] = h                                               # lane-dense f32 store


# ------------------------------- wrapper ------------------------------------

def _round_up(x, m):
    return ((x + m - 1) // m) * m


def mlp_forward(x, params, *, acts, compute_dtype=jnp.bfloat16):
    """Fused MLP forward.

    x:      [B, ...]  (flattened to [B, nf_in], like x.view(B, -1))
    params: list of (w [Din, Dout] f32, b [Dout] f32) per LinearBlock
    acts:   tuple of 'relu' | 'lrelu' | 'tanh' | 'none' per LinearBlock
    """
    B = x.shape[0]
    xf = x.reshape(B, -1).astype(jnp.float32)
    n_layers = len(params)
    dims = [xf.shape[1]] + [w.shape[1] for (w, _) in params]

    # pad: batch -> multiple of 8 (sublanes), features -> multiple of 128 (lanes)
    Mp = _round_up(B, 8)
    dims_p = [_round_up(d, 128) for d in dims]

    xp = jnp.zeros((Mp, dims_p[0]), compute_dtype)
    xp = xp.at[:B, :dims[0]].set(xf.astype(compute_dtype))

    ws, bs = [], []
    for i, (w, b) in enumerate(params):
        wp = jnp.zeros((dims_p[i], dims_p[i + 1]), compute_dtype)
        wp = wp.at[:dims[i], :dims[i + 1]].set(w.astype(compute_dtype))
        bp = jnp.zeros((1, dims_p[i + 1]), jnp.float32)
        bp = bp.at[0, :dims[i + 1]].set(b.astype(jnp.float32))
        ws.append(wp)
        bs.append(bp)

    # one big M block for small batches; split (keeping multiples of 8) only if large
    tm = Mp if Mp <= 256 else 256
    while Mp % tm != 0:
        tm //= 2
    grid = (Mp // tm,)

    in_specs = [pl.BlockSpec((tm, dims_p[0]), lambda i: (i, 0))]
    for li in range(n_layers):
        in_specs.append(
            pl.BlockSpec((dims_p[li], dims_p[li + 1]), lambda i: (0, 0)))
    for li in range(n_layers):
        in_specs.append(pl.BlockSpec((1, dims_p[li + 1]), lambda i: (0, 0)))

    out_padded = pl.pallas_call(
        partial(_mlp_kernel, n_layers=n_layers, acts=tuple(acts)),
        out_shape=jax.ShapeDtypeStruct((Mp, dims_p[-1]), jnp.float32),
        grid_spec=pltpu.PrefetchScalarGridSpec(
            num_scalar_prefetch=0,
            grid=grid,
            in_specs=in_specs,
            out_specs=pl.BlockSpec((tm, dims_p[-1]), lambda i: (i, 0)),
        ),
        compiler_params=pltpu.CompilerParams(
            dimension_semantics=("parallel",)),
    )(xp, *ws, *bs)

    return out_padded[:B, :dims[-1]]


# --------------------------- reference & params ------------------------------

def mlp_reference(x, params, acts):
    """Pure-JAX f32 reference matching the PyTorch MLP forward."""
    h = x.reshape(x.shape[0], -1).astype(jnp.float32)
    for (w, b), a in zip(params, acts):
        h = h @ w + b
        if a == "relu":
            h = jnp.maximum(h, 0.0)
        elif a == "lrelu":
            h = jnp.where(h >= 0.0, h, 0.2 * h)
        elif a == "tanh":
            h = jnp.tanh(h)
    return h


def make_mlp_params(key, nf_in, nf_out, nf_mlp, num_blocks):
    """nn.Linear-style init (U(-1/sqrt(fan_in), 1/sqrt(fan_in))) per LinearBlock."""
    dims = [nf_in] + [nf_mlp] * (num_blocks - 1) + [nf_out]
    params = []
    keys = jax.random.split(key, num_blocks)
    for i in range(num_blocks):
        kw, kb = jax.random.split(keys[i])
        fan_in = dims[i]
        bound = 1.0 / math.sqrt(fan_in)
        w = jax.random.uniform(kw, (dims[i], dims[i + 1]), jnp.float32,
                               -bound, bound)
        b = jax.random.uniform(kb, (dims[i + 1],), jnp.float32, -bound, bound)
        params.append((w, b))
    return params


# ---------------------------------- main -------------------------------------

if __name__ == "__main__":
    # MLP(nf_in=64, nf_out=256, nf_mlp=128, num_blocks=3, norm='none', act='relu')
    # TODO(synk): norm='bn'/'in' inside LinearBlock and use_sn=True (spectral norm)
    #             are not implemented; this instantiation uses norm='none', use_sn=False.
    nf_in, nf_out, nf_mlp, num_blocks = 64, 256, 128, 3
    acts = tuple(["relu"] * (num_blocks - 1) + ["none"])   # last block: act='none'

    key = jax.random.PRNGKey(0)
    kx, kp = jax.random.split(key)
    x = jax.random.normal(kx, (2, 4, 4, 4), jnp.float32)    # flattened to (2, 64)
    params = make_mlp_params(kp, nf_in, nf_out, nf_mlp, num_blocks)

    fwd = jax.jit(partial(mlp_forward, acts=acts))
    out = fwd(x, params)
    jax.block_until_ready(out)

    # correctness vs. pure-JAX f32 reference (loose tolerance: bf16 MXU operands)
    ref = mlp_reference(x, params, acts)
    np.testing.assert_allclose(np.asarray(out), np.asarray(ref),
                               rtol=5e-2, atol=5e-2)

    assert out.shape == (2, nf_out)
    assert out.dtype == jnp.float32
    print("KERNEL_OK")
</pallas_src>

<mosaic_0001>
module attributes {stable_mosaic.version = 11 : i64} {
  func.func @_mlp_kernel(%arg0: i32, %arg1: memref<8x128xbf16, #tpu.memory_space<vmem>>, %arg2: memref<128x128xbf16, #tpu.memory_space<vmem>>, %arg3: memref<128x128xbf16, #tpu.memory_space<vmem>>, %arg4: memref<128x256xbf16, #tpu.memory_space<vmem>>, %arg5: memref<1x128xf32, #tpu.memory_space<vmem>>, %arg6: memref<1x128xf32, #tpu.memory_space<vmem>>, %arg7: memref<1x256xf32, #tpu.memory_space<vmem>>, %arg8: memref<8x256xf32, #tpu.memory_space<vmem>>) attributes {dimension_semantics = [#tpu.dimension_semantics<parallel>], iteration_bounds = array<i64: 1>, scalar_prefetch = 0 : i64, scratch_operands = 0 : i64, tpu.core_type = #tpu.core_type<tc>, window_params = [{transform_indices = @transform_0, window_bounds = array<i64: 8, 128>}, {pipeline_mode = #tpu.pipeline_mode<synchronous>, transform_indices = @transform_1, window_bounds = array<i64: 128, 128>}, {pipeline_mode = #tpu.pipeline_mode<synchronous>, transform_indices = @transform_2, window_bounds = array<i64: 128, 128>}, {pipeline_mode = #tpu.pipeline_mode<synchronous>, transform_indices = @transform_3, window_bounds = array<i64: 128, 256>}, {pipeline_mode = #tpu.pipeline_mode<synchronous>, transform_indices = @transform_4, window_bounds = array<i64: 1, 128>}, {pipeline_mode = #tpu.pipeline_mode<synchronous>, transform_indices = @transform_5, window_bounds = array<i64: 1, 128>}, {pipeline_mode = #tpu.pipeline_mode<synchronous>, transform_indices = @transform_6, window_bounds = array<i64: 1, 256>}, {transform_indices = @transform_7, window_bounds = array<i64: 8, 256>}]} {
    %c0 = arith.constant 0 : index
    %c0_0 = arith.constant 0 : index
    %0 = vector.load %arg1[%c0, %c0_0] : memref<8x128xbf16, #tpu.memory_space<vmem>>, vector<8x128xbf16>
    %c0_1 = arith.constant 0 : index
    %c0_2 = arith.constant 0 : index
    %1 = vector.load %arg2[%c0_1, %c0_2] : memref<128x128xbf16, #tpu.memory_space<vmem>>, vector<128x128xbf16>
    %cst = arith.constant dense<0.000000e+00> : vector<8x128xf32>
    %2 = tpu.matmul %0, %1, %cst {dimension_numbers = #tpu.dot_dimension_numbers<[1], [0], [0], [1], [0, 0, 1, 1], [], []>} : vector<8x128xbf16>, vector<128x128xbf16>, vector<8x128xf32> -> vector<8x128xf32>
    %c0_3 = arith.constant 0 : index
    %c0_4 = arith.constant 0 : index
    %3 = vector.load %arg5[%c0_3, %c0_4] : memref<1x128xf32, #tpu.memory_space<vmem>>, vector<1x128xf32>
    %4 = vector.broadcast %3 : vector<1x128xf32> to vector<8x128xf32>
    %5 = arith.addf %2, %4 : vector<8x128xf32>
    %cst_5 = arith.constant 0.000000e+00 : f32
    %6 = vector.broadcast %cst_5 : f32 to vector<8x128xf32>
    %7 = arith.maximumf %5, %6 : vector<8x128xf32>
    %8 = arith.truncf %7 : vector<8x128xf32> to vector<8x128xbf16>
    %c0_6 = arith.constant 0 : index
    %c0_7 = arith.constant 0 : index
    %9 = vector.load %arg3[%c0_6, %c0_7] : memref<128x128xbf16, #tpu.memory_space<vmem>>, vector<128x128xbf16>
    %cst_8 = arith.constant dense<0.000000e+00> : vector<8x128xf32>
    %10 = tpu.matmul %8, %9, %cst_8 {dimension_numbers = #tpu.dot_dimension_numbers<[1], [0], [0], [1], [0, 0, 1, 1], [], []>} : vector<8x128xbf16>, vector<128x128xbf16>, vector<8x128xf32> -> vector<8x128xf32>
    %c0_9 = arith.constant 0 : index
    %c0_10 = arith.constant 0 : index
    %11 = vector.load %arg6[%c0_9, %c0_10] : memref<1x128xf32, #tpu.memory_space<vmem>>, vector<1x128xf32>
    %12 = vector.broadcast %11 : vector<1x128xf32> to vector<8x128xf32>
    %13 = arith.addf %10, %12 : vector<8x128xf32>
    %cst_11 = arith.constant 0.000000e+00 : f32
    %14 = vector.broadcast %cst_11 : f32 to vector<8x128xf32>
    %15 = arith.maximumf %13, %14 : vector<8x128xf32>
    %16 = arith.truncf %15 : vector<8x128xf32> to vector<8x128xbf16>
    %c0_12 = arith.constant 0 : index
    %c0_13 = arith.constant 0 : index
    %17 = vector.load %arg4[%c0_12, %c0_13] : memref<128x256xbf16, #tpu.memory_space<vmem>>, vector<128x256xbf16>
    %cst_14 = arith.constant dense<0.000000e+00> : vector<8x256xf32>
    %18 = tpu.matmul %16, %17, %cst_14 {dimension_numbers = #tpu.dot_dimension_numbers<[1], [0], [0], [1], [0, 0, 1, 1], [], []>} : vector<8x128xbf16>, vector<128x256xbf16>, vector<8x256xf32> -> vector<8x256xf32>
    %c0_15 = arith.constant 0 : index
    %c0_16 = arith.constant 0 : index
    %19 = vector.load %arg7[%c0_15, %c0_16] : memref<1x256xf32, #tpu.memory_space<vmem>>, vector<1x256xf32>
    %20 = vector.broadcast %19 : vector<1x256xf32> to vector<8x256xf32>
    %21 = arith.addf %18, %20 : vector<8x256xf32>
    %c0_17 = arith.constant 0 : index
    %c0_18 = arith.constant 0 : index
    %22 = vector.load %arg8[%c0_17, %c0_18] : memref<8x256xf32, #tpu.memory_space<vmem>>, vector<8x256xf32>
    tpu.vector_store %arg8[%c0_17, %c0_18], %21 {strides = array<i32>} : memref<8x256xf32, #tpu.memory_space<vmem>>, vector<8x256xf32>,
    return
  }
  func.func @transform_0(%arg0: i32) -> (i32, i32) {
    %c0_i32 = arith.constant 0 : i32
    %c0_i32_0 = arith.constant 0 : i32
    return %arg0, %c0_i32 : i32, i32
  }
  func.func @transform_1(%arg0: i32) -> (i32, i32) {
    %c0_i32 = arith.constant 0 : i32
    %c0_i32_0 = arith.constant 0 : i32
    %c0_i32_1 = arith.constant 0 : i32
    return %c0_i32, %c0_i32_0 : i32, i32
  }
  func.func @transform_2(%arg0: i32) -> (i32, i32) {
    %c0_i32 = arith.constant 0 : i32
    %c0_i32_0 = arith.constant 0 : i32
    %c0_i32_1 = arith.constant 0 : i32
    return %c0_i32, %c0_i32_0 : i32, i32
  }
  func.func @transform_3(%arg0: i32) -> (i32, i32) {
    %c0_i32 = arith.constant 0 : i32
    %c0_i32_0 = arith.constant 0 : i32
    %c0_i32_1 = arith.constant 0 : i32
    return %c0_i32, %c0_i32_0 : i32, i32
  }
  func.func @transform_4(%arg0: i32) -> (i32, i32) {
    %c0_i32 = arith.constant 0 : i32
    %c0_i32_0 = arith.constant 0 : i32
    %c0_i32_1 = arith.constant 0 : i32
    return %c0_i32, %c0_i32_0 : i32, i32
  }
  func.func @transform_5(%arg0: i32) -> (i32, i32) {
    %c0_i32 = arith.constant 0 : i32
    %c0_i32_0 = arith.constant 0 : i32
    %c0_i32_1 = arith.constant 0 : i32
    return %c0_i32, %c0_i32_0 : i32, i32
  }
  func.func @transform_6(%arg0: i32) -> (i32, i32) {
    %c0_i32 = arith.constant 0 : i32
    %c0_i32_0 = arith.constant 0 : i32
    %c0_i32_1 = arith.constant 0 : i32
    return %c0_i32, %c0_i32_0 : i32, i32
  }
  func.func @transform_7(%arg0: i32) -> (i32, i32) {
    %c0_i32 = arith.constant 0 : i32
    %c0_i32_0 = arith.constant 0 : i32
    return %arg0, %c0_i32 : i32, i32
  }
}

</mosaic_0001>

<llo_original>
// kernel: mlp_forward.1
$region0: #{mlp_forward.1}
  #allocation0 [shape = 'u32[]', space=smem, size = 0x4, offset = 0x4, fixed_abs, tag = 'smem constant byte address 0x4 - core index']
  #allocation1 [shape = 'u32[144,128]{1,0:T(1,128)}', space=vmem, size = 0x12000, scoped, tag = 'internal scratch']
  %s0 = inlined_call_operand.vmem [shape: bf16[8,128], index: 0, kind: input, shape index: {}]
  %s1 = inlined_call_operand.vmem [shape: bf16[128,128], index: 1, kind: input, shape index: {}]
  %s2 = inlined_call_operand.vmem [shape: bf16[128,128], index: 2, kind: input, shape index: {}]
  %s3 = inlined_call_operand.vmem [shape: bf16[128,256], index: 3, kind: input, shape index: {}]
  %s4 = inlined_call_operand.vmem [shape: f32[1,128], index: 4, kind: input, shape index: {}]
  %s5 = inlined_call_operand.vmem [shape: f32[1,128], index: 5, kind: input, shape index: {}]
  %s6 = inlined_call_operand.vmem [shape: f32[1,256], index: 6, kind: input, shape index: {}]
  %s7 = inlined_call_operand.vmem [shape: f32[8,256], index: 7, kind: output, shape index: {}]
  %s8 = sld [smem:[#allocation0]]
  $region38: #{mlp_forward.1} parent=0
    _
  %s10 = ssub.s32 1, %s8
  %s11 = scalar_select 0, %s10, %s8
  // Predicated region
  $region2: #{mlp_forward.1} parent=0 // pred_check
    _
  $region3: #{mlp_forward.1} parent=0 // pred_check_branch
    %13 = sbr.rel (0) target = $region5
  $region4: #{mlp_forward.1} parent=0 // pred_region
    _
  $region5: #{mlp_forward.1} parent=0 // pred_fallthru
    _
  // Predicated region
  $region6: #{mlp_forward.1} parent=0 // pred_check
    _
  $region7: #{mlp_forward.1} parent=0 // pred_check_branch
    %15 = sbr.rel (0) target = $region9
  $region8: #{mlp_forward.1} parent=0 // pred_region
    _
  $region9: #{mlp_forward.1} parent=0 // pred_fallthru
    _
  // Predicated region
  $region10: #{mlp_forward.1} parent=0 // pred_check
    _
  $region11: #{mlp_forward.1} parent=0 // pred_check_branch
    %17 = sbr.rel (0) target = $region13
  $region12: #{mlp_forward.1} parent=0 // pred_region
    _
  $region13: #{mlp_forward.1} parent=0 // pred_fallthru
    _
  // Predicated region
  $region14: #{mlp_forward.1} parent=0 // pred_check
    _
  $region15: #{mlp_forward.1} parent=0 // pred_check_branch
    %19 = sbr.rel (0) target = $region17
  $region16: #{mlp_forward.1} parent=0 // pred_region
    _
  $region17: #{mlp_forward.1} parent=0 // pred_fallthru
    _
  // Predicated region
  $region18: #{mlp_forward.1} parent=0 // pred_check
    _
  $region19: #{mlp_forward.1} parent=0 // pred_check_branch
    %21 = sbr.rel (0) target = $region21
  $region20: #{mlp_forward.1} parent=0 // pred_region
    _
  $region21: #{mlp_forward.1} parent=0 // pred_fallthru
    _
  // Predicated region
  $region22: #{mlp_forward.1} parent=0 // pred_check
    _
  $region23: #{mlp_forward.1} parent=0 // pred_check_branch
    %23 = sbr.rel (0) target = $region25
  $region24: #{mlp_forward.1} parent=0 // pred_region
    _
  $region25: #{mlp_forward.1} parent=0 // pred_fallthru
    _
  // Predicated region
  $region26: #{mlp_forward.1} parent=0 // pred_check
    _
  $region27: #{mlp_forward.1} parent=0 // pred_check_branch
    %25 = sbr.rel (0) target = $region29
  $region28: #{mlp_forward.1} parent=0 // pred_region
    _
  $region29: #{mlp_forward.1} parent=0 // pred_fallthru
    _
  %v27 = vld [vmem:[%s0] sm:$0xf]
  %v28 = vld [vmem:[%s1] sm:$0xf]
  %v29 = vld [vmem:[%s1 + $0x4] sm:$0xf]
  %v30 = vld [vmem:[%s1 + $0x8] sm:$0xf]
  %v31 = vld [vmem:[%s1 + $0xc] sm:$0xf]
  %v32 = vld [vmem:[%s1 + $0x10] sm:$0xf]
  %v33 = vld [vmem:[%s1 + $0x14] sm:$0xf]
  %v34 = vld [vmem:[%s1 + $0x18] sm:$0xf]
  %v35 = vld [vmem:[%s1 + $0x1c] sm:$0xf]
  %v36 = vld [vmem:[%s1 + $0x20] sm:$0xf]
  %v37 = vld [vmem:[%s1 + $0x24] sm:$0xf]
  %v38 = vld [vmem:[%s1 + $0x28] sm:$0xf]
  %v39 = vld [vmem:[%s1 + $0x2c] sm:$0xf]
  %v40 = vld [vmem:[%s1 + $0x30] sm:$0xf]
  %v41 = vld [vmem:[%s1 + $0x34] sm:$0xf]
  %v42 = vld [vmem:[%s1 + $0x38] sm:$0xf]
  %v43 = vld [vmem:[%s1 + $0x3c] sm:$0xf]
  %v44 = vld [vmem:[%s4] sm:$0x1]
  %v46 = vlaneseq
  %v47 = vshrl.u32 %v46, 7
  %v48 = vsub.s32 0, %v47
  %v49 = vrot.slane %v44, %v48
  %v67 = vunpack.c.l.b16 %v28
  %v68 = vunpack.c.l.b16 %v29
  %v69 = vunpack.c.l.b16 %v30
  %v70 = vunpack.c.l.b16 %v31
  %v71 = vunpack.c.l.b16 %v32
  %v72 = vunpack.c.l.b16 %v33
  %v73 = vunpack.c.l.b16 %v34
  %v74 = vunpack.c.l.b16 %v35
  %v75 = vunpack.c.l.b16 %v36
  %v76 = vunpack.c.l.b16 %v37
  %v77 = vunpack.c.l.b16 %v38
  %v78 = vunpack.c.l.b16 %v39
  %v79 = vunpack.c.l.b16 %v40
  %v80 = vunpack.c.l.b16 %v41
  %v81 = vunpack.c.l.b16 %v42
  %v82 = vunpack.c.l.b16 %v43
  %v83 = vpack.c.b16 %v68, %v67
  %v84 = vpack.c.b16 %v70, %v69
  %v85 = vpack.c.b16 %v72, %v71
  %v86 = vpack.c.b16 %v74, %v73
  %v87 = vpack.c.b16 %v76, %v75
  %v88 = vpack.c.b16 %v78, %v77
  %v89 = vpack.c.b16 %v80, %v79
  %v90 = vpack.c.b16 %v82, %v81
  %99 = vmatprep.subr.bf16.mxu0 0
  %100 = vmatpush1.bf16.msra.mxu0 %v83
  %101 = vmatprep.subr.bf16.mxu0 0
  %102 = vmatpush1.bf16.msra.mxu0 %v84
  %103 = vmatprep.subr.bf16.mxu0 0
  %104 = vmatpush1.bf16.msra.mxu0 %v85
  %105 = vmatprep.subr.bf16.mxu0 0
  %106 = vmatpush1.bf16.msra.mxu0 %v86
  %107 = vmatprep.subr.bf16.mxu0 0
  %108 = vmatpush1.bf16.msra.mxu0 %v87
  %109 = vmatprep.subr.bf16.mxu0 0
  %110 = vmatpush1.bf16.msra.mxu0 %v88
  %111 = vmatprep.subr.bf16.mxu0 0
  %112 = vmatpush1.bf16.msra.mxu0 %v89
  %113 = vmatprep.subr.bf16.mxu0 0
  %114 = vmatpush1.bf16.msra.mxu0 %v90
  %115 = vmatprep.subr.bf16.mxu0 0
  %116 = vmatpush1.bf16.msra.mxu0 0
  %117 = vmatprep.subr.bf16.mxu0 0
  %118 = vmatpush1.bf16.msra.mxu0 0
  %119 = vmatprep.subr.bf16.mxu0 0
  %120 = vmatpush1.bf16.msra.mxu0 0
  %121 = vmatprep.subr.bf16.mxu0 0
  %122 = vmatpush1.bf16.msra.mxu0 0
  %123 = vmatprep.subr.bf16.mxu0 0
  %124 = vmatpush1.bf16.msra.mxu0 0
  %125 = vmatprep.subr.bf16.mxu0 0
  %126 = vmatpush1.bf16.msra.mxu0 0
  %127 = vmatprep.subr.bf16.mxu0 0
  %128 = vmatpush1.bf16.msra.mxu0 0
  %129 = vmatprep.subr.bf16.mxu0 0
  %130 = vmatpush1.bf16.msra.mxu0 0
  %131 = vmatprep.mubr.bf16.mxu0 0
  %132 = vmatmul.mubr.bf16.gmra.mrb[0].mxu0 %v27
  %v133 = vpop.f32.mrb[0].mxu0
  %v134 = vadd.f32 %v49, %v133
  %v135 = vpop.f32.mrb[0].mxu0
  %v136 = vpop.f32.mrb[0].mxu0
  %v137 = vpop.f32.mrb[0].mxu0
  %138 = vdwg.mxu0
  %v139 = vmax.f32 %v134, 0.0
  %v140 = vpack.c.bf16 %v139, %v139
  %v141 = vld [vmem:[%s2] sm:$0xf]
  %v142 = vld [vmem:[%s2 + $0x4] sm:$0xf]
  %v143 = vld [vmem:[%s2 + $0x8] sm:$0xf]
  %v144 = vld [vmem:[%s2 + $0xc] sm:$0xf]
  %v145 = vld [vmem:[%s2 + $0x10] sm:$0xf]
  %v146 = vld [vmem:[%s2 + $0x14] sm:$0xf]
  %v147 = vld [vmem:[%s2 + $0x18] sm:$0xf]
  %v148 = vld [vmem:[%s2 + $0x1c] sm:$0xf]
  %v149 = vld [vmem:[%s2 + $0x20] sm:$0xf]
  %v150 = vld [vmem:[%s2 + $0x24] sm:$0xf]
  %v151 = vld [vmem:[%s2 + $0x28] sm:$0xf]
  %v152 = vld [vmem:[%s2 + $0x2c] sm:$0xf]
  %v153 = vld [vmem:[%s2 + $0x30] sm:$0xf]
  %v154 = vld [vmem:[%s2 + $0x34] sm:$0xf]
  %v155 = vld [vmem:[%s2 + $0x38] sm:$0xf]
  %v156 = vld [vmem:[%s2 + $0x3c] sm:$0xf]
  %v157 = vld [vmem:[%s5] sm:$0x1]
  %v159 = vlaneseq
  %v160 = vshrl.u32 %v159, 7
  %v161 = vsub.s32 0, %v160
  %v162 = vrot.slane %v157, %v161
  %v180 = vunpack.c.l.b16 %v141
  %v181 = vunpack.c.l.b16 %v142
  %v182 = vunpack.c.l.b16 %v143
  %v183 = vunpack.c.l.b16 %v144
  %v184 = vunpack.c.l.b16 %v145
  %v185 = vunpack.c.l.b16 %v146
  %v186 = vunpack.c.l.b16 %v147
  %v187 = vunpack.c.l.b16 %v148
  %v188 = vunpack.c.l.b16 %v149
  %v189 = vunpack.c.l.b16 %v150
  %v190 = vunpack.c.l.b16 %v151
  %v191 = vunpack.c.l.b16 %v152
  %v192 = vunpack.c.l.b16 %v153
  %v193 = vunpack.c.l.b16 %v154
  %v194 = vunpack.c.l.b16 %v155
  %v195 = vunpack.c.l.b16 %v156
  %v196 = vpack.c.b16 %v181, %v180
  %v197 = vpack.c.b16 %v183, %v182
  %v198 = vpack.c.b16 %v185, %v184
  %v199 = vpack.c.b16 %v187, %v186
  %v200 = vpack.c.b16 %v189, %v188
  %v201 = vpack.c.b16 %v191, %v190
  %v202 = vpack.c.b16 %v193, %v192
  %v203 = vpack.c.b16 %v195, %v194
  %212 = vmatprep.subr.bf16.mxu0 0
  %213 = vmatpush1.bf16.msra.mxu0 %v196
  %214 = vmatprep.subr.bf16.mxu0 0
  %215 = vmatpush1.bf16.msra.mxu0 %v197
  %216 = vmatprep.subr.bf16.mxu0 0
  %217 = vmatpush1.bf16.msra.mxu0 %v198
  %218 = vmatprep.subr.bf16.mxu0 0
  %219 = vmatpush1.bf16.msra.mxu0 %v199
  %220 = vmatprep.subr.bf16.mxu0 0
  %221 = vmatpush1.bf16.msra.mxu0 %v200
  %222 = vmatprep.subr.bf16.mxu0 0
  %223 = vmatpush1.bf16.msra.mxu0 %v201
  %224 = vmatprep.subr.bf16.mxu0 0
  %225 = vmatpush1.bf16.msra.mxu0 %v202
  %226 = vmatprep.subr.bf16.mxu0 0
  %227 = vmatpush1.bf16.msra.mxu0 %v203
  %228 = vmatprep.subr.bf16.mxu0 0
  %229 = vmatpush1.bf16.msra.mxu0 0
  %230 = vmatprep.subr.bf16.mxu0 0
  %231 = vmatpush1.bf16.msra.mxu0 0
  %232 = vmatprep.subr.bf16.mxu0 0
  %233 = vmatpush1.bf16.msra.mxu0 0
  %234 = vmatprep.subr.bf16.mxu0 0
  %235 = vmatpush1.bf16.msra.mxu0 0
  %236 = vmatprep.subr.bf16.mxu0 0
  %237 = vmatpush1.bf16.msra.mxu0 0
  %238 = vmatprep.subr.bf16.mxu0 0
  %239 = vmatpush1.bf16.msra.mxu0 0
  %240 = vmatprep.subr.bf16.mxu0 0
  %241 = vmatpush1.bf16.msra.mxu0 0
  %242 = vmatprep.subr.bf16.mxu0 0
  %243 = vmatpush1.bf16.msra.mxu0 0
  %244 = vmatprep.mubr.bf16.mxu0 0
  %245 = vmatmul.mubr.bf16.gmra.mrb[0].mxu0 %v140
  %v246 = vpop.f32.mrb[0].mxu0
  %v247 = vadd.f32 %v162, %v246
  %v248 = vpop.f32.mrb[0].mxu0
  %v249 = vpop.f32.mrb[0].mxu0
  %v250 = vpop.f32.mrb[0].mxu0
  %251 = vdwg.mxu0
  %v252 = vmax.f32 %v247, 0.0
  %v253 = vpack.c.bf16 %v252, %v252
  %v254 = vld [vmem:[%s3] sm:$0xff]
  %v255 = vld [vmem:[%s3 + $0x8] sm:$0xff]
  %v256 = vld [vmem:[%s3 + $0x10] sm:$0xff]
  %v257 = vld [vmem:[%s3 + $0x18] sm:$0xff]
  %v258 = vld [vmem:[%s3 + $0x20] sm:$0xff]
  %v259 = vld [vmem:[%s3 + $0x28] sm:$0xff]
  %v260 = vld [vmem:[%s3 + $0x30] sm:$0xff]
  %v261 = vld [vmem:[%s3 + $0x38] sm:$0xff]
  %v262 = vld [vmem:[%s3 + $0x40] sm:$0xff]
  %v263 = vld [vmem:[%s3 + $0x48] sm:$0xff]
  %v264 = vld [vmem:[%s3 + $0x50] sm:$0xff]
  %v265 = vld [vmem:[%s3 + $0x58] sm:$0xff]
  %v266 = vld [vmem:[%s3 + $0x60] sm:$0xff]
  %v267 = vld [vmem:[%s3 + $0x68] sm:$0xff]
  %v268 = vld [vmem:[%s3 + $0x70] sm:$0xff]
  %v269 = vld [vmem:[%s3 + $0x78] sm:$0xff]
  %v270 = vld [vmem:[%s6] sm:$0x3]
  %v272 = vlaneseq
  %v273 = vshrl.u32 %v272, 7
  %v274 = vsub.s32 0, %v273
  %v275 = vrot.slane %v270, %v274
  %v276 = vlaneseq
  %v277 = vshrl.u32 %v276, 7
  %v278 = vsub.s32 1, %v277
  %v279 = vrot.slane %v270, %v278
  %v298 = vunpack.c.l.b16 %v254
  %v299 = vunpack.c.h.b16 %v254
  %v300 = vunpack.c.l.b16 %v255
  %v301 = vunpack.c.h.b16 %v255
  %v302 = vunpack.c.l.b16 %v256
  %v303 = vunpack.c.h.b16 %v256
  %v304 = vunpack.c.l.b16 %v257
  %v305 = vunpack.c.h.b16 %v257
  %v306 = vunpack.c.l.b16 %v258
  %v307 = vunpack.c.h.b16 %v258
  %v308 = vunpack.c.l.b16 %v259
  %v309 = vunpack.c.h.b16 %v259
  %v310 = vunpack.c.l.b16 %v260
  %v311 = vunpack.c.h.b16 %v260
  %v312 = vunpack.c.l.b16 %v261
  %v313 = vunpack.c.h.b16 %v261
  %v314 = vunpack.c.l.b16 %v262
  %v315 = vunpack.c.h.b16 %v262
  %v316 = vunpack.c.l.b16 %v263
  %v317 = vunpack.c.h.b16 %v263
  %v318 = vunpack.c.l.b16 %v264
  %v319 = vunpack.c.h.b16 %v264
  %v320 = vunpack.c.l.b16 %v265
  %v321 = vunpack.c.h.b16 %v265
  %v322 = vunpack.c.l.b16 %v266
  %v323 = vunpack.c.h.b16 %v266
  %v324 = vunpack.c.l.b16 %v267
  %v325 = vunpack.c.h.b16 %v267
  %v326 = vunpack.c.l.b16 %v268
  %v327 = vunpack.c.h.b16 %v268
  %v328 = vunpack.c.l.b16 %v269
  %v329 = vunpack.c.h.b16 %v269
  %v330 = vpack.c.b16 %v300, %v298
  %v331 = vpack.c.b16 %v301, %v299
  %v332 = vpack.c.b16 %v304, %v302
  %v333 = vpack.c.b16 %v305, %v303
  %v334 = vpack.c.b16 %v308, %v306
  %v335 = vpack.c.b16 %v309, %v307
  %v336 = vpack.c.b16 %v312, %v310
  %v337 = vpack.c.b16 %v313, %v311
  %v338 = vpack.c.b16 %v316, %v314
  %v339 = vpack.c.b16 %v317, %v315
  %v340 = vpack.c.b16 %v320, %v318
  %v341 = vpack.c.b16 %v321, %v319
  %v342 = vpack.c.b16 %v324, %v322
  %v343 = vpack.c.b16 %v325, %v323
  %v344 = vpack.c.b16 %v328, %v326
  %v345 = vpack.c.b16 %v329, %v327
  %362 = vmatprep.subr.bf16.mxu0 %v331
  %363 = vmatpush1.bf16.msra.mxu0 %v330
  %364 = vmatprep.subr.bf16.mxu0 %v333
  %365 = vmatpush1.bf16.msra.mxu0 %v332
  %366 = vmatprep.subr.bf16.mxu0 %v335
  %367 = vmatpush1.bf16.msra.mxu0 %v334
  %368 = vmatprep.subr.bf16.mxu0 %v337
  %369 = vmatpush1.bf16.msra.mxu0 %v336
  %370 = vmatprep.subr.bf16.mxu0 %v339
  %371 = vmatpush1.bf16.msra.mxu0 %v338
  %372 = vmatprep.subr.bf16.mxu0 %v341
  %373 = vmatpush1.bf16.msra.mxu0 %v340
  %374 = vmatprep.subr.bf16.mxu0 %v343
  %375 = vmatpush1.bf16.msra.mxu0 %v342
  %376 = vmatprep.subr.bf16.mxu0 %v345
  %377 = vmatpush1.bf16.msra.mxu0 %v344
  %378 = vmatprep.subr.bf16.mxu0 0
  %379 = vmatpush1.bf16.msra.mxu0 0
  %380 = vmatprep.subr.bf16.mxu0 0
  %381 = vmatpush1.bf16.msra.mxu0 0
  %382 = vmatprep.subr.bf16.mxu0 0
  %383 = vmatpush1.bf16.msra.mxu0 0
  %384 = vmatprep.subr.bf16.mxu0 0
  %385 = vmatpush1.bf16.msra.mxu0 0
  %386 = vmatprep.subr.bf16.mxu0 0
  %387 = vmatpush1.bf16.msra.mxu0 0
  %388 = vmatprep.subr.bf16.mxu0 0
  %389 = vmatpush1.bf16.msra.mxu0 0
  %390 = vmatprep.subr.bf16.mxu0 0
  %391 = vmatpush1.bf16.msra.mxu0 0
  %392 = vmatprep.subr.bf16.mxu0 0
  %393 = vmatpush1.bf16.msra.mxu0 0
  %394 = vmatprep.mubr.bf16.mxu0 0
  %395 = vmatmul.mubr.bf16.gmra.mrb[0].mxu0 %v253
  %v396 = vpop.f32.mrb[0].mxu0
  %v397 = vadd.f32 %v275, %v396
  %v398 = vpop.f32.mrb[0].mxu0
  %v399 = vadd.f32 %v279, %v398
  %v400 = vpop.f32.mrb[0].mxu0
  %v401 = vpop.f32.mrb[0].mxu0
  %402 = vdwg.mxu0
  %403 = vst [vmem:[%s7] sm:$0xff] %v397
  %404 = vst [vmem:[%s7 + $0x8] sm:$0xff] %v399
  // Predicated region
  $region30: #{mlp_forward.1} parent=0 // pred_check
    _
  $region31: #{mlp_forward.1} parent=0 // pred_check_branch
    %406 = sbr.rel (0) target = $region33
  $region32: #{mlp_forward.1} parent=0 // pred_region
    _
  $region33: #{mlp_forward.1} parent=0 // pred_fallthru
    _
  // Predicated region
  $region34: #{mlp_forward.1} parent=0 // pred_check
    _
  $region35: #{mlp_forward.1} parent=0 // pred_check_branch
    %408 = sbr.rel (0) target = $region37
  $region36: #{mlp_forward.1} parent=0 // pred_region
    _
  $region37: #{mlp_forward.1} parent=0 // pred_fallthru
    _

</llo_original>
